<compile_context>
chip_gen: v5e
topology: v5e:2x2
jax: 0.10.0
libtpu: 0.0.40
codegen_flags: <defaults>
</compile_context>

<pallas_src>
import functools

import jax
import jax.numpy as jnp
from jax.experimental import pallas as pl
from jax.experimental.pallas import tpu as pltpu

_LANE = 128


def _round_up(n, m):
    return ((n + m - 1) // m) * m


def _sublane_for(dtype):
    # f32 -> 8, bf16 -> 16, int8/fp8 -> 32 (sub-32-bit dtypes pack along sublanes).
    itemsize = jnp.dtype(dtype).itemsize
    return {4: 8, 2: 16, 1: 32}.get(itemsize, 8)


def _fused_linear_relu_kernel(x_ref, w_ref, b_ref, o_priv_ref, o_comm_ref, *, f_out):
    # One MXU contraction covers both branches: (tile_b, F_in) @ (F_in, N_pad).
    acc = jnp.dot(x_ref[...], w_ref[...], preferred_element_type=jnp.float32)
    y = jnp.maximum(acc + b_ref[...], 0.0)          # f32 epilogue (v5e-safe)
    # Only the real columns are stored; the lane-pad columns never leave the
    # vregs (static lane slices cost an XLU rotate, which has slack).
    o_priv_ref[...] = y[:, :f_out].astype(o_priv_ref.dtype)
    o_comm_ref[...] = y[:, f_out:2 * f_out].astype(o_comm_ref.dtype)


def prepare_view_block_params(w_private, b_private, w_comm, b_comm,
                              operand_dtype=jnp.float32):
    """One-time parameter prep (call at init, NOT per forward).

    PyTorch nn.Linear stores W as (F_out, F_in); we pre-transpose to
    (F_in, F_out), fuse the two branches along the output dim
    ([private | comm]) and zero-pad that dim up to a multiple of 128 lanes so
    the MXU sees a full tile.  Weights are cast to `operand_dtype`
    (use bfloat16 on v6e/v7x to halve operand bandwidth); the bias stays f32
    because the epilogue accumulates in f32.  Returns (w_cat, b_cat, f_out).
    """
    f_out, _ = w_private.shape
    w_cat = jnp.concatenate(
        [jnp.asarray(w_private).T, jnp.asarray(w_comm).T], axis=1)   # (F_in, 2*F_out)
    b_cat = jnp.concatenate(
        [jnp.asarray(b_private), jnp.asarray(b_comm)], axis=0)       # (2*F_out,)
    n = 2 * f_out
    n_pad = _round_up(n, _LANE)
    if n_pad != n:
        w_cat = jnp.pad(w_cat, ((0, 0), (0, n_pad - n)))
        b_cat = jnp.pad(b_cat, ((0, n_pad - n),))
    w_cat = w_cat.astype(operand_dtype)
    b_cat = b_cat.astype(jnp.float32).reshape(1, n_pad)
    return w_cat, b_cat, f_out


@functools.partial(jax.jit, static_argnames=("f_out", "max_tile_b"))
def view_block_forward(x, w_cat, b_cat, *, f_out, max_tile_b=8192):
    """x: (B, F_in); w_cat: (F_in, N_pad); b_cat: (1, N_pad) f32.

    Returns (x_private, x_comm_feature), each (B, f_out) f32, matching
    relu(x @ W_priv^T + b_priv), relu(x @ W_comm^T + b_comm).
    """
    B, f_in = x.shape
    n_pad = w_cat.shape[1]
    x = x.astype(w_cat.dtype)       # bf16 operand path halves the x read stream

    sub = _sublane_for(x.dtype)
    if B <= sub:
        # Full-dim batch block: always layout-legal, single grid step.
        tile_b = B
    else:
        # Big tiles amortize the ~0.35us/step overhead and DMA ramp, but cap at
        # ~B/2 so large batches give >= 2 grid steps ("parallel" axis can then
        # shard across v7x's two TensorCores).  Per-tile VMEM at 8192 rows is a
        # few MiB double-buffered -- far under every chip's scoped limit.
        cap = max(sub, (max_tile_b // sub) * sub)
        tile_b = min(cap, _round_up(pl.cdiv(B, 2), sub))
    grid_b = pl.cdiv(B, tile_b)     # ragged last block is clipped by Pallas

    kernel = functools.partial(_fused_linear_relu_kernel, f_out=f_out)
    x_private, x_comm_feature = pl.pallas_call(
        kernel,
        out_shape=(jax.ShapeDtypeStruct((B, f_out), jnp.float32),
                   jax.ShapeDtypeStruct((B, f_out), jnp.float32)),
        grid=(grid_b,),
        in_specs=[
            pl.BlockSpec((tile_b, f_in), lambda i: (i, 0)),   # streamed x tile
            pl.BlockSpec((f_in, n_pad), lambda i: (0, 0)),    # resident weights
            pl.BlockSpec((1, n_pad), lambda i: (0, 0)),       # resident bias
        ],
        out_specs=(
            pl.BlockSpec((tile_b, f_out), lambda i: (i, 0)),  # private branch
            pl.BlockSpec((tile_b, f_out), lambda i: (i, 0)),  # comm branch
        ),
        compiler_params=pltpu.CompilerParams(
            dimension_semantics=("parallel",)),
    )(x, w_cat, b_cat)
    return x_private, x_comm_feature


def _init_params(key, input_feature_num, output_feature_num):
    """Deterministic init mimicking nn.Linear default (uniform ±1/sqrt(fan_in))."""
    k1, k2, k3, k4 = jax.random.split(key, 4)
    bound = 1.0 / (input_feature_num ** 0.5)
    w_private = jax.random.uniform(
        k1, (output_feature_num, input_feature_num),
        minval=-bound, maxval=bound, dtype=jnp.float32)
    b_private = jax.random.uniform(
        k2, (output_feature_num,), minval=-bound, maxval=bound, dtype=jnp.float32)
    w_comm = jax.random.uniform(
        k3, (output_feature_num, input_feature_num),
        minval=-bound, maxval=bound, dtype=jnp.float32)
    b_comm = jax.random.uniform(
        k4, (output_feature_num,), minval=-bound, maxval=bound, dtype=jnp.float32)
    return w_private, b_private, w_comm, b_comm


if __name__ == "__main__":
    batch = 8
    input_feature_num = 32
    output_feature_num = 16

    key = jax.random.PRNGKey(0)
    kx, kp = jax.random.split(key)
    x = jax.random.normal(kx, (batch, input_feature_num), dtype=jnp.float32)
    w_private, b_private, w_comm, b_comm = _init_params(
        kp, input_feature_num, output_feature_num)

    ref_priv = jnp.maximum(x @ w_private.T + b_private, 0.0)
    ref_comm = jnp.maximum(x @ w_comm.T + b_comm, 0.0)

    # --- f32 operand path (default; v5e-safe) -------------------------------
    w_cat, b_cat, f_out = prepare_view_block_params(
        w_private, b_private, w_comm, b_comm)
    x_private, x_comm_feature = view_block_forward(x, w_cat, b_cat, f_out=f_out)
    jax.block_until_ready((x_private, x_comm_feature))

    assert x_private.shape == (batch, output_feature_num)
    assert x_comm_feature.shape == (batch, output_feature_num)
    assert jnp.allclose(x_private, ref_priv, atol=1e-5)
    assert jnp.allclose(x_comm_feature, ref_comm, atol=1e-5)

    # --- bf16 operand path (v6e/v7x bandwidth saver; f32 accumulate/output) --
    w_cat16, b_cat16, _ = prepare_view_block_params(
        w_private, b_private, w_comm, b_comm, operand_dtype=jnp.bfloat16)
    xp16, xc16 = view_block_forward(x, w_cat16, b_cat16, f_out=f_out)
    jax.block_until_ready((xp16, xc16))
    assert jnp.allclose(xp16, ref_priv, atol=5e-2, rtol=5e-2)
    assert jnp.allclose(xc16, ref_comm, atol=5e-2, rtol=5e-2)

    print("KERNEL_OK")
</pallas_src>

<mosaic_0001>
module attributes {stable_mosaic.version = 11 : i64} {
  func.func @_fused_linear_relu_kernel(%arg0: i32, %arg1: memref<8x32xf32, #tpu.memory_space<vmem>>, %arg2: memref<32x128xf32, #tpu.memory_space<vmem>>, %arg3: memref<1x128xf32, #tpu.memory_space<vmem>>, %arg4: memref<8x16xf32, #tpu.memory_space<vmem>>, %arg5: memref<8x16xf32, #tpu.memory_space<vmem>>) attributes {dimension_semantics = [#tpu.dimension_semantics<parallel>], iteration_bounds = array<i64: 1>, scalar_prefetch = 0 : i64, scratch_operands = 0 : i64, tpu.core_type = #tpu.core_type<tc>, window_params = [{transform_indices = @transform_0, window_bounds = array<i64: 8, 32>}, {pipeline_mode = #tpu.pipeline_mode<synchronous>, transform_indices = @transform_1, window_bounds = array<i64: 32, 128>}, {pipeline_mode = #tpu.pipeline_mode<synchronous>, transform_indices = @transform_2, window_bounds = array<i64: 1, 128>}, {transform_indices = @transform_3, window_bounds = array<i64: 8, 16>}, {transform_indices = @transform_4, window_bounds = array<i64: 8, 16>}]} {
    %c0 = arith.constant 0 : index
    %c0_0 = arith.constant 0 : index
    %0 = vector.load %arg1[%c0, %c0_0] : memref<8x32xf32, #tpu.memory_space<vmem>>, vector<8x32xf32>
    %c0_1 = arith.constant 0 : index
    %c0_2 = arith.constant 0 : index
    %1 = vector.load %arg2[%c0_1, %c0_2] : memref<32x128xf32, #tpu.memory_space<vmem>>, vector<32x128xf32>
    %cst = arith.constant dense<0.000000e+00> : vector<8x128xf32>
    %2 = tpu.matmul %0, %1, %cst {dimension_numbers = #tpu.dot_dimension_numbers<[1], [0], [0], [1], [0, 0, 1, 1], [], []>} : vector<8x32xf32>, vector<32x128xf32>, vector<8x128xf32> -> vector<8x128xf32>
    %c0_3 = arith.constant 0 : index
    %c0_4 = arith.constant 0 : index
    %3 = vector.load %arg3[%c0_3, %c0_4] : memref<1x128xf32, #tpu.memory_space<vmem>>, vector<1x128xf32>
    %4 = vector.broadcast %3 : vector<1x128xf32> to vector<8x128xf32>
    %5 = arith.addf %2, %4 : vector<8x128xf32>
    %cst_5 = arith.constant 0.000000e+00 : f32
    %6 = vector.broadcast %cst_5 : f32 to vector<8x128xf32>
    %7 = arith.maximumf %5, %6 : vector<8x128xf32>
    %8 = vector.extract_strided_slice %7 {offsets = [0, 0], sizes = [8, 16], strides = [1, 1]} : vector<8x128xf32> to vector<8x16xf32>
    %c0_6 = arith.constant 0 : index
    %c0_7 = arith.constant 0 : index
    %9 = vector.load %arg4[%c0_6, %c0_7] : memref<8x16xf32, #tpu.memory_space<vmem>>, vector<8x16xf32>
    tpu.vector_store %arg4[%c0_6, %c0_7], %8 {strides = array<i32>} : memref<8x16xf32, #tpu.memory_space<vmem>>, vector<8x16xf32>,
    %10 = vector.extract_strided_slice %7 {offsets = [0, 16], sizes = [8, 16], strides = [1, 1]} : vector<8x128xf32> to vector<8x16xf32>
    %c0_8 = arith.constant 0 : index
    %c0_9 = arith.constant 0 : index
    %11 = vector.load %arg5[%c0_8, %c0_9] : memref<8x16xf32, #tpu.memory_space<vmem>>, vector<8x16xf32>
    tpu.vector_store %arg5[%c0_8, %c0_9], %10 {strides = array<i32>} : memref<8x16xf32, #tpu.memory_space<vmem>>, vector<8x16xf32>,
    return
  }
  func.func @transform_0(%arg0: i32) -> (i32, i32) {
    %c0_i32 = arith.constant 0 : i32
    %c0_i32_0 = arith.constant 0 : i32
    return %arg0, %c0_i32 : i32, i32
  }
  func.func @transform_1(%arg0: i32) -> (i32, i32) {
    %c0_i32 = arith.constant 0 : i32
    %c0_i32_0 = arith.constant 0 : i32
    %c0_i32_1 = arith.constant 0 : i32
    return %c0_i32, %c0_i32_0 : i32, i32
  }
  func.func @transform_2(%arg0: i32) -> (i32, i32) {
    %c0_i32 = arith.constant 0 : i32
    %c0_i32_0 = arith.constant 0 : i32
    %c0_i32_1 = arith.constant 0 : i32
    return %c0_i32, %c0_i32_0 : i32, i32
  }
  func.func @transform_3(%arg0: i32) -> (i32, i32) {
    %c0_i32 = arith.constant 0 : i32
    %c0_i32_0 = arith.constant 0 : i32
    return %arg0, %c0_i32 : i32, i32
  }
  func.func @transform_4(%arg0: i32) -> (i32, i32) {
    %c0_i32 = arith.constant 0 : i32
    %c0_i32_0 = arith.constant 0 : i32
    return %arg0, %c0_i32 : i32, i32
  }
}

</mosaic_0001>

<llo_original>
// kernel: view_block_forward.1
$region0: #{view_block_forward.1}
  #allocation0 [shape = 'u32[]', space=smem, size = 0x4, offset = 0x4, fixed_abs, tag = 'smem constant byte address 0x4 - core index']
  #allocation1 [shape = 'u32[72,128]{1,0:T(1,128)}', space=vmem, size = 0x9000, scoped, tag = 'internal scratch']
  %s0 = inlined_call_operand.hbm [shape: f32[8,32], index: 0, kind: input, shape index: {}]
  %s1 = inlined_call_operand.hbm [shape: f32[32,128], index: 1, kind: input, shape index: {}]
  %s2 = inlined_call_operand.vmem [shape: f32[1,128], index: 2, kind: input, shape index: {}]
  %s3 = inlined_call_operand.hbm [shape: f32[8,16], index: 3, kind: output, shape index: {0}]
  %s4 = inlined_call_operand.hbm [shape: f32[8,16], index: 4, kind: output, shape index: {1}]
  %5 = xla_tuple %s3, %s4
  %s6 = sld [smem:[#allocation0]]
  $region38: #{view_block_forward.1} parent=0
    _
  %s8 = ssub.s32 1, %s6
  %s9 = scalar_select 0, %s8, %s6
  $region1: #{view_block_forward.1} parent=0
    #allocation2 [shape = 'u8[4096]{0}', space=vmem, size = 0x1000, scoped, tag = 'input window, operand 0, single buffered']
    #allocation3 [shape = 's32[1]{0}', space=sflag, size = 0x4, scoped, tag = 'scoped memory for view_block_forward.1']
    #allocation4 [shape = 's32[1]{0}', space=sflag, size = 0x4, scoped, tag = 'scoped memory for view_block_forward.1']
    #allocation5 [shape = 'u8[16384]{0}', space=vmem, size = 0x4000, scoped, tag = 'input window, operand 1, single buffered']
    #allocation6 [shape = 's32[1]{0}', space=sflag, size = 0x4, scoped, tag = 'scoped memory for view_block_forward.1']
    #allocation7 [shape = 'u8[4096]{0}', space=vmem, size = 0x1000, scoped, tag = 'output window, operand 0, single buffered']
    #allocation8 [shape = 'u8[4096]{0}', space=vmem, size = 0x1000, scoped, tag = 'output window, operand 1, single buffered']
    #allocation9 [shape = 's32[1]{0}', space=sflag, size = 0x4, scoped, tag = 'scoped memory for view_block_forward.1']
    %10 = vsyncpa [#allocation3], 0
    %11 = vsyncpa [#allocation6], 0
    %12 = vsyncpa [#allocation4], 0
    %13 = vsyncpa [#allocation9], 0
    // Predicated region
    $region2: #{view_block_forward.1} parent=1 // pred_check
      _
    $region3: #{view_block_forward.1} parent=1 // pred_check_branch
      %15 = sbr.rel (0) target = $region5
    $region4: #{view_block_forward.1} parent=1 // pred_region
      %17 = vsyncadd [#allocation3], 0
      %s19 = sshll.u32 %s0, 4
      %s20 = int_to_ptr.hbm [resolvable:$true] %s19
      %s21 = sshll.u32 [#allocation2], 4
      %s22 = int_to_ptr.vmem [resolvable:$true] %s21
      %24 = dma.hbm_to_vmem [thread:$0]  %s20, 128, %s22, [#allocation3]
    $region5: #{view_block_forward.1} parent=1 // pred_fallthru
      _
    // Predicated region
    $region6: #{view_block_forward.1} parent=1 // pred_check
      _
    $region7: #{view_block_forward.1} parent=1 // pred_check_branch
      %26 = sbr.rel (0) target = $region9
    $region8: #{view_block_forward.1} parent=1 // pred_region
      %28 = vsyncadd [#allocation6], 0
      %s29 = sshll.u32 %s1, 4
      %s30 = int_to_ptr.hbm [resolvable:$true] %s29
      %s31 = sshll.u32 [#allocation5], 4
      %s32 = int_to_ptr.vmem [resolvable:$true] %s31
      %37 = dma.hbm_to_vmem [thread:$0]  %s30, 512, %s32, [#allocation6], 128, 128, 8
    $region9: #{view_block_forward.1} parent=1 // pred_fallthru
      _
    // Predicated region
    $region10: #{view_block_forward.1} parent=1 // pred_check
      _
    $region11: #{view_block_forward.1} parent=1 // pred_check_branch
      %39 = sbr.rel (0) target = $region13
    $region12: #{view_block_forward.1} parent=1 // pred_region
      _
    $region13: #{view_block_forward.1} parent=1 // pred_fallthru
      _
    // Predicated region
    $region14: #{view_block_forward.1} parent=1 // pred_check
      _
    $region15: #{view_block_forward.1} parent=1 // pred_check_branch
      %41 = sbr.rel (0) target = $region17
    $region16: #{view_block_forward.1} parent=1 // pred_region
      %43 = dma.done [#allocation3], 128
    $region17: #{view_block_forward.1} parent=1 // pred_fallthru
      _
    // Predicated region
    $region18: #{view_block_forward.1} parent=1 // pred_check
      _
    $region19: #{view_block_forward.1} parent=1 // pred_check_branch
      %45 = sbr.rel (0) target = $region21
    $region20: #{view_block_forward.1} parent=1 // pred_region
      %47 = dma.done [#allocation6], 512
    $region21: #{view_block_forward.1} parent=1 // pred_fallthru
      _
    %v48 = vld [vmem:[#allocation2] sm:$0xff]
    %v49 = vld [vmem:[#allocation5] sm:$0xff]
    %v50 = vld [vmem:[#allocation5 + $0x8] sm:$0xff]
    %v51 = vld [vmem:[#allocation5 + $0x10] sm:$0xff]
    %v52 = vld [vmem:[#allocation5 + $0x18] sm:$0xff]
    %v53 = vld [vmem:[%s2] sm:$0x1]
    %v55 = vperm.slane %v53, 0
    %vm57 = vcmask 261120
    %v59 = vsel %vm57, %v48, 0
    %61 = vmatpush.msra.mxu0 0.0
    %62 = vmatpush.msra.mxu0 0.0
    %63 = vmatpush.msra.mxu0 0.0
    %64 = vmatpush.msra.mxu0 0.0
    %65 = vmatpush.msra.mxu0 0.0
    %66 = vmatpush.msra.mxu0 0.0
    %67 = vmatpush.msra.mxu0 0.0
    %68 = vmatpush.msra.mxu0 0.0
    %69 = vmatpush.msra.mxu0 0.0
    %70 = vmatpush.msra.mxu0 0.0
    %71 = vmatpush.msra.mxu0 0.0
    %72 = vmatpush.msra.mxu0 0.0
    %73 = vmatpush.msra.mxu0 %v52
    %74 = vmatpush.msra.mxu0 %v51
    %75 = vmatpush.msra.mxu0 %v50
    %76 = vmatpush.msra.mxu0 %v49
    %77 = vmatmul.f32.gmra.mxu0 %v59
    %v78 = vpop.f32.mrf.mxu0
    %v79 = vadd.f32 %v55, %v78
    %80 = vdwg.mxu0
    %v81 = vmax.f32 %v79, 0.0
    %vm82 = vcmask 130048
    %83 = vst.msk [vmem:[#allocation7] sm:$0xff] %vm82, %v81
    %85 = vrot.lane.b32.xlu0 %v81, 112
    %v86 = vpop.permute.xlu0 %85
    %88 = vst.msk [vmem:[#allocation8] sm:$0xff] %vm82, %v86
    // Predicated region
    $region22: #{view_block_forward.1} parent=1 // pred_check
      _
    $region23: #{view_block_forward.1} parent=1 // pred_check_branch
      %90 = sbr.rel (0) target = $region25
    $region24: #{view_block_forward.1} parent=1 // pred_region
      %92 = vsyncadd [#allocation4], 0
      %s94 = sshll.u32 [#allocation7], 4
      %s95 = int_to_ptr.vmem [resolvable:$true] %s94
      %s96 = sshll.u32 %s3, 4
      %s97 = int_to_ptr.hbm [resolvable:$true] %s96
      %99 = dma.vmem_to_hbm [thread:$0]  %s95, 128, %s97, [#allocation4]
    $region25: #{view_block_forward.1} parent=1 // pred_fallthru
      _
    // Predicated region
    $region26: #{view_block_forward.1} parent=1 // pred_check
      _
    $region27: #{view_block_forward.1} parent=1 // pred_check_branch
      %101 = sbr.rel (0) target = $region29
    $region28: #{view_block_forward.1} parent=1 // pred_region
      %103 = vsyncadd [#allocation9], 0
      %s105 = sshll.u32 [#allocation8], 4
      %s106 = int_to_ptr.vmem [resolvable:$true] %s105
      %s107 = sshll.u32 %s4, 4
      %s108 = int_to_ptr.hbm [resolvable:$true] %s107
      %110 = dma.vmem_to_hbm [thread:$0]  %s106, 128, %s108, [#allocation9]
    $region29: #{view_block_forward.1} parent=1 // pred_fallthru
      _
    // Predicated region
    $region30: #{view_block_forward.1} parent=1 // pred_check
      _
    $region31: #{view_block_forward.1} parent=1 // pred_check_branch
      %112 = sbr.rel (0) target = $region33
    $region32: #{view_block_forward.1} parent=1 // pred_region
      %114 = dma.done [#allocation4], 128
    $region33: #{view_block_forward.1} parent=1 // pred_fallthru
      _
    // Predicated region
    $region34: #{view_block_forward.1} parent=1 // pred_check
      _
    $region35: #{view_block_forward.1} parent=1 // pred_check_branch
      %116 = sbr.rel (0) target = $region37
    $region36: #{view_block_forward.1} parent=1 // pred_region
      %118 = dma.done [#allocation9], 128
    $region37: #{view_block_forward.1} parent=1 // pred_fallthru
      _
    %119 = vsyncpa [#allocation3], 1
    %120 = vsyncpa [#allocation6], 1
    %121 = vsyncpa [#allocation4], 1
    %122 = vsyncpa [#allocation9], 1

</llo_original>
